<compile_context>
chip_gen: v5e
topology: v5e:2x2
jax: 0.10.0
libtpu: 0.0.40
codegen_flags: <defaults>
</compile_context>

<pallas_src>
import functools
from typing import NamedTuple, Optional

import jax
import jax.numpy as jnp
from jax import lax
from jax.experimental import pallas as pl
from jax.experimental.pallas import tpu as pltpu

LN_EPS = 1e-5


def _round_up(x, m):
    return ((x + m - 1) // m) * m


def _sublane(dtype) -> int:
    # sublane packing factor: 8 for 4-byte, 16 for 2-byte, 32 for 1-byte dtypes
    return max(8, 32 // jnp.dtype(dtype).itemsize)


def _vmem_budget_bytes() -> int:
    # ~75% of physical per-core VMEM: ~48 MiB on v7x, ~96 MiB on v5e/v6e.
    cap = 64 << 20
    try:
        info = pltpu.get_tpu_info()
        cap = int(getattr(info, "vmem_capacity_bytes", cap)) or cap
    except Exception:
        pass
    return (cap * 3) // 4


# Flipped to False (once, process-wide) if this jax build rejects pl.Buffered(1).
_SINGLE_BUFFER_OK = [True]


class RandomINRParams(NamedTuple):
    wt: jax.Array                 # (K_stored, out_pad) padded W^T in matmul dtype
    g2d: Optional[jax.Array]      # (1, out_pad) f32 LayerNorm gamma, or None (default)
    b2d: Optional[jax.Array]      # (1, out_pad) f32 LayerNorm beta, or None (default)
    in_features: int
    out_features: int
    out_pad: int
    nk: int                       # number of K blocks (1 => weight fully resident)
    k_block: int                  # K block size when nk > 1


def prepare_random_inr_params(weight, gamma=None, beta=None, *,
                              matmul_dtype=None,
                              k_block=None,
                              max_resident_weight_bytes=None) -> RandomINRParams:
    """Precompute padded W^T and LayerNorm params ONCE (the weight is a fixed buffer),
    so the per-call forward pays no weight transpose/pad HBM pass."""
    out_f, in_f = weight.shape
    out_pad = _round_up(out_f, 128)
    wdtype = jnp.dtype(matmul_dtype) if matmul_dtype is not None else jnp.dtype(weight.dtype)
    w_item = wdtype.itemsize

    budget = _vmem_budget_bytes()
    if max_resident_weight_bytes is None:
        max_resident_weight_bytes = budget // 3

    if in_f * out_pad * w_item <= max_resident_weight_bytes:
        # Small/medium layer: keep the whole W^T resident, K left unpadded.
        nk, kb, k_stored = 1, in_f, in_f
    else:
        # Wide layer: stream K blocks (K-split), K padded to a multiple of the block.
        kb = 512 if k_block is None else k_block
        kb = max(128, _round_up(kb, 128))
        while kb > 128 and 2 * kb * out_pad * w_item > budget // 4:
            kb //= 2
        kb = max(128, (kb // 128) * 128)
        k_stored = _round_up(in_f, kb)
        nk = k_stored // kb

    w_t = jnp.pad(weight.astype(wdtype).T,
                  ((0, k_stored - in_f), (0, out_pad - out_f)))

    if gamma is None and beta is None:
        g2d = b2d = None            # default LN affine (ones/zeros): skip the FMA entirely
    else:
        g = jnp.ones((out_f,), jnp.float32) if gamma is None else gamma.astype(jnp.float32)
        b = jnp.zeros((out_f,), jnp.float32) if beta is None else beta.astype(jnp.float32)
        g2d = jnp.pad(g, (0, out_pad - out_f)).reshape(1, out_pad)
        b2d = jnp.pad(b, (0, out_pad - out_f)).reshape(1, out_pad)

    return RandomINRParams(w_t, g2d, b2d, in_f, out_f, out_pad, nk, kb)


def _random_inr_kernel(*refs, is_activate, out_valid, pad_cols, has_affine, nk):
    """Fused linear (no bias) + optional sine + LayerNorm.

    refs = (x, wt, [gamma, beta,] out, [acc])   — acc only when nk > 1.
    """
    x_ref, wt_ref = refs[0], refs[1]
    i = 2
    if has_affine:
        g_ref, b_ref = refs[i], refs[i + 1]
        i += 2
    else:
        g_ref = b_ref = None
    o_ref = refs[i]
    acc_ref = refs[i + 1] if nk > 1 else None

    def finalize(y):
        if is_activate:
            y = jnp.sin(y)          # sin(0)=0 keeps zero-padded OUT columns zero
        # Dropout is identity in eval mode (no-op).
        inv_n = jnp.float32(1.0 / out_valid)
        mean = jnp.sum(y, axis=-1, keepdims=True) * inv_n   # padded cols are exactly 0
        cent = y - mean
        ss = jnp.sum(cent * cent, axis=-1, keepdims=True)
        if pad_cols:
            # each zero-padded column contributed exactly mean^2 to ss — subtract it
            ss = ss - jnp.float32(pad_cols) * (mean * mean)
        y_hat = cent * lax.rsqrt(ss * inv_n + jnp.float32(LN_EPS))
        if has_affine:
            y_hat = y_hat * g_ref[...] + b_ref[...]
        o_ref[...] = y_hat.astype(o_ref.dtype)

    if nk == 1:
        # Whole K resident: single MXU matmul, f32 accumulation.
        finalize(jnp.dot(x_ref[...], wt_ref[...], preferred_element_type=jnp.float32))
    else:
        k = pl.program_id(1)

        @pl.when(k == 0)
        def _():
            acc_ref[...] = jnp.zeros_like(acc_ref)

        acc_ref[...] += jnp.dot(x_ref[...], wt_ref[...],
                                preferred_element_type=jnp.float32)

        @pl.when(k == nk - 1)
        def _():
            finalize(acc_ref[...])


def random_inr_apply(x, params: RandomINRParams, *, is_activate: bool, tm: int = 1024):
    """x: [..., in_features] -> [..., out_features]."""
    in_f, out_f, out_pad = params.in_features, params.out_features, params.out_pad
    nk, kb = params.nk, params.k_block
    k_stored = params.wt.shape[0]
    has_affine = params.g2d is not None

    orig_shape = x.shape
    out_dtype = x.dtype
    mm_dtype = params.wt.dtype

    x2d = x.reshape(-1, in_f)
    if x2d.dtype != mm_dtype:
        x2d = x2d.astype(mm_dtype)
    n = x2d.shape[0]

    x_item = jnp.dtype(mm_dtype).itemsize
    o_item = jnp.dtype(out_dtype).itemsize
    sub = max(_sublane(mm_dtype), _sublane(out_dtype))
    rows = _round_up(max(n, 1), sub)

    budget = _vmem_budget_bytes()
    # Resident across the row sweep: whole W^T (single-buffered) or streaming K blocks.
    resident = params.wt.size * x_item if nk == 1 else 2 * kb * out_pad * x_item
    if has_affine:
        resident += 4 * out_pad * 4
    k_tile = k_stored if nk == 1 else kb
    # Per-row: double-buffered x & out tiles + f32 accumulator / LN temporaries headroom.
    per_row = 2 * k_tile * x_item + 2 * out_pad * o_item + 4 * out_pad * 4

    avail = budget - resident - (2 << 20)
    tm_budget = max(sub, (avail // max(per_row, 1)) // sub * sub)
    # Keep >= 2 row grid steps when there are enough rows so v7x's two TCs both work.
    tm_cores = rows if rows <= sub else _round_up(pl.cdiv(rows, 2), sub)
    tm_eff = max(sub, (min(tm, tm_budget, tm_cores) // sub) * sub)

    n_rows = _round_up(rows, tm_eff)
    if (n_rows, k_stored) != x2d.shape:
        x2d = jnp.pad(x2d, ((0, n_rows - n), (0, k_stored - in_f)))

    vmem_needed = resident + tm_eff * per_row + (1 << 20)
    vmem_limit = int(min(budget, max(int(vmem_needed * 1.5), 32 << 20)))

    kernel = functools.partial(
        _random_inr_kernel, is_activate=is_activate, out_valid=out_f,
        pad_cols=out_pad - out_f, has_affine=has_affine, nk=nk)

    cost = pl.CostEstimate(
        flops=2 * n * in_f * out_f,
        transcendentals=(n * out_f) if is_activate else 0,
        bytes_accessed=(x2d.size * x_item + params.wt.size * x_item
                        + (2 * out_pad * 4 if has_affine else 0)
                        + n_rows * out_pad * o_item))

    args = (x2d, params.wt) + ((params.g2d, params.b2d) if has_affine else ())
    scratch = [pltpu.VMEM((tm_eff, out_pad), jnp.float32)] if nk > 1 else []

    def build_in_specs(single_buffer):
        def const_spec(shape):
            # Constant index_map: fetched once; single-buffer to halve residency.
            if single_buffer:
                return pl.BlockSpec(shape, lambda i, k: (0, 0),
                                    pipeline_mode=pl.Buffered(1))
            return pl.BlockSpec(shape, lambda i, k: (0, 0))

        x_spec = pl.BlockSpec((tm_eff, k_tile), lambda i, k: (i, k))
        if nk == 1:
            w_spec = const_spec((k_stored, out_pad))
        else:
            w_spec = pl.BlockSpec((kb, out_pad), lambda i, k: (k, 0))
        specs = [x_spec, w_spec]
        if has_affine:
            specs += [const_spec((1, out_pad)), const_spec((1, out_pad))]
        return specs

    def run(single_buffer):
        return pl.pallas_call(
            kernel,
            out_shape=jax.ShapeDtypeStruct((n_rows, out_pad), out_dtype),
            grid_spec=pltpu.PrefetchScalarGridSpec(
                num_scalar_prefetch=0,
                grid=(n_rows // tm_eff, nk),
                in_specs=build_in_specs(single_buffer),
                out_specs=pl.BlockSpec((tm_eff, out_pad), lambda i, k: (i, 0)),
                scratch_shapes=scratch),
            compiler_params=pltpu.CompilerParams(
                dimension_semantics=("parallel", "arbitrary"),
                vmem_limit_bytes=vmem_limit),
            cost_estimate=cost,
        )(*args)

    if _SINGLE_BUFFER_OK[0]:
        try:
            out2d = run(True)
        except Exception:
            _SINGLE_BUFFER_OK[0] = False
            out2d = run(False)
    else:
        out2d = run(False)

    return out2d[:n, :out_f].reshape(orig_shape[:-1] + (out_f,))


def random_inr_reference(x, weight, gamma, beta, *, is_activate):
    """Pure-JAX reference mirroring the PyTorch forward (eval mode)."""
    y = jnp.einsum("...i,oi->...o", x, weight)
    if is_activate:
        y = jnp.sin(y)
    mean = jnp.mean(y, axis=-1, keepdims=True)
    var = jnp.mean((y - mean) ** 2, axis=-1, keepdims=True)
    y_hat = (y - mean) * lax.rsqrt(var + LN_EPS)
    return y_hat * gamma + beta


if __name__ == "__main__":
    # Shapes consistent with the module's forward:
    #   input_size = 32, output_size = 64, x: [batch=2, seq=8, 32]
    input_size, output_size = 32, 64
    batch, seq = 2, 8

    key = jax.random.PRNGKey(0)
    k_x, k_w = jax.random.split(key)

    x = jax.random.normal(k_x, (batch, seq, input_size), dtype=jnp.float32)
    # Deterministic stand-in for the torch.randn(output_size, input_size) buffer.
    weight = jax.random.normal(k_w, (output_size, input_size), dtype=jnp.float32)
    gamma = jnp.ones((output_size,), dtype=jnp.float32)   # nn.LayerNorm default init
    beta = jnp.zeros((output_size,), dtype=jnp.float32)

    # Weight prep hoisted out of the forward path (done once).
    params = prepare_random_inr_params(weight, gamma, beta)

    out = jax.block_until_ready(random_inr_apply(x, params, is_activate=True))
    ref = random_inr_reference(x, weight, gamma, beta, is_activate=True)
    assert out.shape == (batch, seq, output_size)
    assert jnp.allclose(out, ref, atol=1e-4, rtol=1e-4), "mismatch vs reference"

    # Non-tile-divisible row count, no activation, default LN affine (FMA skipped).
    params_noaff = prepare_random_inr_params(weight)
    x2 = jax.random.normal(k_x, (3, 5, input_size), dtype=jnp.float32)
    out2 = jax.block_until_ready(random_inr_apply(x2, params_noaff, is_activate=False))
    ref2 = random_inr_reference(x2, weight, gamma, beta, is_activate=False)
    assert jnp.allclose(out2, ref2, atol=1e-4, rtol=1e-4), "mismatch (no act)"

    # Exercise the K-split (streaming weight + f32 accumulator) path on a wider layer.
    in3, out3 = 512, 256
    k_w3, k_x3 = jax.random.split(k_w)
    w3 = jax.random.normal(k_w3, (out3, in3), dtype=jnp.float32)
    x3 = jax.random.normal(k_x3, (4, 16, in3), dtype=jnp.float32)
    params3 = prepare_random_inr_params(w3, max_resident_weight_bytes=0, k_block=128)
    assert params3.nk > 1
    out3_ = jax.block_until_ready(random_inr_apply(x3, params3, is_activate=True))
    ref3 = random_inr_reference(x3, w3, jnp.ones((out3,)), jnp.zeros((out3,)),
                                is_activate=True)
    assert jnp.allclose(out3_, ref3, atol=1e-3, rtol=1e-3), "mismatch (K-split)"

    # bf16 matmul path (LayerNorm stats stay f32) — loose tolerance by construction.
    params_bf16 = prepare_random_inr_params(weight, gamma, beta,
                                            matmul_dtype=jnp.bfloat16)
    out4 = jax.block_until_ready(random_inr_apply(x, params_bf16, is_activate=False))
    ref4 = random_inr_reference(x, weight, gamma, beta, is_activate=False)
    assert jnp.allclose(out4, ref4, atol=1e-1, rtol=1e-1), "mismatch (bf16 path)"

    print("KERNEL_OK")
</pallas_src>

<mosaic_0001>
module attributes {stable_mosaic.version = 11 : i64} {
  func.func @_random_inr_kernel(%arg0: i32, %arg1: i32, %arg2: memref<8x32xf32, #tpu.memory_space<vmem>>, %arg3: memref<32x128xf32, #tpu.memory_space<vmem>>, %arg4: memref<1x128xf32, #tpu.memory_space<vmem>>, %arg5: memref<1x128xf32, #tpu.memory_space<vmem>>, %arg6: memref<8x128xf32, #tpu.memory_space<vmem>>) attributes {dimension_semantics = [#tpu.dimension_semantics<parallel>, #tpu.dimension_semantics<arbitrary>], iteration_bounds = array<i64: 2, 1>, scalar_prefetch = 0 : i64, scratch_operands = 0 : i64, tpu.core_type = #tpu.core_type<tc>, window_params = [{transform_indices = @transform_0, window_bounds = array<i64: 8, 32>}, {pipeline_mode = #tpu.pipeline_mode<synchronous>, transform_indices = @transform_1, window_bounds = array<i64: 32, 128>}, {pipeline_mode = #tpu.pipeline_mode<synchronous>, transform_indices = @transform_2, window_bounds = array<i64: 1, 128>}, {pipeline_mode = #tpu.pipeline_mode<synchronous>, transform_indices = @transform_3, window_bounds = array<i64: 1, 128>}, {transform_indices = @transform_4, window_bounds = array<i64: 8, 128>}]} {
    %c0 = arith.constant 0 : index
    %c0_0 = arith.constant 0 : index
    %0 = vector.load %arg2[%c0, %c0_0] : memref<8x32xf32, #tpu.memory_space<vmem>>, vector<8x32xf32>
    %c0_1 = arith.constant 0 : index
    %c0_2 = arith.constant 0 : index
    %1 = vector.load %arg3[%c0_1, %c0_2] : memref<32x128xf32, #tpu.memory_space<vmem>>, vector<32x128xf32>
    %cst = arith.constant dense<0.000000e+00> : vector<8x128xf32>
    %2 = tpu.matmul %0, %1, %cst {dimension_numbers = #tpu.dot_dimension_numbers<[1], [0], [0], [1], [0, 0, 1, 1], [], []>} : vector<8x32xf32>, vector<32x128xf32>, vector<8x128xf32> -> vector<8x128xf32>
    %3 = math.sin %2 : vector<8x128xf32>
    %cst_3 = arith.constant dense<0.000000e+00> : vector<8xf32>
    %4 = vector.multi_reduction <add>, %3, %cst_3 [1] : vector<8x128xf32> to vector<8xf32>
    %5 = vector.shape_cast %4 : vector<8xf32> to vector<8x1xf32>
    %cst_4 = arith.constant 1.562500e-02 : f32
    %6 = vector.broadcast %cst_4 : f32 to vector<8x1xf32>
    %7 = arith.mulf %5, %6 : vector<8x1xf32>
    %8 = vector.broadcast %7 : vector<8x1xf32> to vector<8x128xf32>
    %9 = arith.subf %3, %8 : vector<8x128xf32>
    %10 = arith.mulf %9, %9 : vector<8x128xf32>
    %cst_5 = arith.constant dense<0.000000e+00> : vector<8xf32>
    %11 = vector.multi_reduction <add>, %10, %cst_5 [1] : vector<8x128xf32> to vector<8xf32>
    %12 = vector.shape_cast %11 : vector<8xf32> to vector<8x1xf32>
    %13 = arith.mulf %7, %7 : vector<8x1xf32>
    %cst_6 = arith.constant 6.400000e+01 : f32
    %14 = vector.broadcast %cst_6 : f32 to vector<8x1xf32>
    %15 = arith.mulf %14, %13 : vector<8x1xf32>
    %16 = arith.subf %12, %15 : vector<8x1xf32>
    %cst_7 = arith.constant 1.562500e-02 : f32
    %17 = vector.broadcast %cst_7 : f32 to vector<8x1xf32>
    %18 = arith.mulf %16, %17 : vector<8x1xf32>
    %cst_8 = arith.constant 9.99999974E-6 : f32
    %19 = vector.broadcast %cst_8 : f32 to vector<8x1xf32>
    %20 = arith.addf %18, %19 : vector<8x1xf32>
    %21 = math.rsqrt %20 : vector<8x1xf32>
    %22 = vector.broadcast %21 : vector<8x1xf32> to vector<8x128xf32>
    %23 = arith.mulf %9, %22 : vector<8x128xf32>
    %c0_9 = arith.constant 0 : index
    %c0_10 = arith.constant 0 : index
    %24 = vector.load %arg4[%c0_9, %c0_10] : memref<1x128xf32, #tpu.memory_space<vmem>>, vector<1x128xf32>
    %25 = vector.broadcast %24 : vector<1x128xf32> to vector<8x128xf32>
    %26 = arith.mulf %23, %25 : vector<8x128xf32>
    %c0_11 = arith.constant 0 : index
    %c0_12 = arith.constant 0 : index
    %27 = vector.load %arg5[%c0_11, %c0_12] : memref<1x128xf32, #tpu.memory_space<vmem>>, vector<1x128xf32>
    %28 = vector.broadcast %27 : vector<1x128xf32> to vector<8x128xf32>
    %29 = arith.addf %26, %28 : vector<8x128xf32>
    %c0_13 = arith.constant 0 : index
    %c0_14 = arith.constant 0 : index
    %30 = vector.load %arg6[%c0_13, %c0_14] : memref<8x128xf32, #tpu.memory_space<vmem>>, vector<8x128xf32>
    tpu.vector_store %arg6[%c0_13, %c0_14], %29 {strides = array<i32>} : memref<8x128xf32, #tpu.memory_space<vmem>>, vector<8x128xf32>,
    return
  }
  func.func @transform_0(%arg0: i32, %arg1: i32) -> (i32, i32) {
    %c0_i32 = arith.constant 0 : i32
    return %arg0, %arg1 : i32, i32
  }
  func.func @transform_1(%arg0: i32, %arg1: i32) -> (i32, i32) {
    %c0_i32 = arith.constant 0 : i32
    %c0_i32_0 = arith.constant 0 : i32
    %c0_i32_1 = arith.constant 0 : i32
    return %c0_i32, %c0_i32_0 : i32, i32
  }
  func.func @transform_2(%arg0: i32, %arg1: i32) -> (i32, i32) {
    %c0_i32 = arith.constant 0 : i32
    %c0_i32_0 = arith.constant 0 : i32
    %c0_i32_1 = arith.constant 0 : i32
    return %c0_i32, %c0_i32_0 : i32, i32
  }
  func.func @transform_3(%arg0: i32, %arg1: i32) -> (i32, i32) {
    %c0_i32 = arith.constant 0 : i32
    %c0_i32_0 = arith.constant 0 : i32
    %c0_i32_1 = arith.constant 0 : i32
    return %c0_i32, %c0_i32_0 : i32, i32
  }
  func.func @transform_4(%arg0: i32, %arg1: i32) -> (i32, i32) {
    %c0_i32 = arith.constant 0 : i32
    %c0_i32_0 = arith.constant 0 : i32
    return %arg0, %c0_i32 : i32, i32
  }
}

module attributes {stable_mosaic.version = 11 : i64} {
  func.func @_random_inr_kernel(%arg0: i32, %arg1: i32, %arg2: memref<8x32xf32, #tpu.memory_space<vmem>>, %arg3: memref<32x128xf32, #tpu.memory_space<vmem>>, %arg4: memref<1x128xf32, #tpu.memory_space<vmem>>, %arg5: memref<1x128xf32, #tpu.memory_space<vmem>>, %arg6: memref<8x128xf32, #tpu.memory_space<vmem>>) attributes {dimension_semantics = [#tpu.dimension_semantics<parallel>, #tpu.dimension_semantics<arbitrary>], iteration_bounds = array<i64: 2, 1>, scalar_prefetch = 0 : i64, scratch_operands = 0 : i64, tpu.core_type = #tpu.core_type<tc>, window_params = [{transform_indices = @transform_0, window_bounds = array<i64: 8, 32>}, {pipeline_mode = #tpu.pipeline_mode<synchronous>, transform_indices = @transform_1, window_bounds = array<i64: 32, 128>}, {pipeline_mode = #tpu.pipeline_mode<synchronous>, transform_indices = @transform_2, window_bounds = array<i64: 1, 128>}, {pipeline_mode = #tpu.pipeline_mode<synchronous>, transform_indices = @transform_3, window_bounds = array<i64: 1, 128>}, {transform_indices = @transform_4, window_bounds = array<i64: 8, 128>}]} {
    %c0 = arith.constant 0 : index
    %c0_0 = arith.constant 0 : index
    %0 = vector.load %arg2[%c0, %c0_0] : memref<8x32xf32, #tpu.memory_space<vmem>>, vector<8x32xf32>
    %c0_1 = arith.constant 0 : index
    %c0_2 = arith.constant 0 : index
    %1 = vector.load %arg3[%c0_1, %c0_2] : memref<32x128xf32, #tpu.memory_space<vmem>>, vector<32x128xf32>
    %cst = arith.constant dense<0.000000e+00> : vector<8x128xf32>
    %2 = tpu.matmul %0, %1, %cst {dimension_numbers = #tpu.dot_dimension_numbers<[1], [0], [0], [1], [0, 0, 1, 1], [], []>} : vector<8x32xf32>, vector<32x128xf32>, vector<8x128xf32> -> vector<8x128xf32>
    %3 = math.sin %2 : vector<8x128xf32>
    %cst_3 = arith.constant dense<0.000000e+00> : vector<8xf32>
    %4 = vector.multi_reduction <add>, %3, %cst_3 [1] : vector<8x128xf32> to vector<8xf32>
    %5 = vector.shape_cast %4 : vector<8xf32> to vector<8x1xf32>
    %cst_4 = arith.constant 1.562500e-02 : f32
    %6 = vector.broadcast %cst_4 : f32 to vector<8x1xf32>
    %7 = arith.mulf %5, %6 : vector<8x1xf32>
    %8 = vector.broadcast %7 : vector<8x1xf32> to vector<8x128xf32>
    %9 = arith.subf %3, %8 : vector<8x128xf32>
    %10 = arith.mulf %9, %9 : vector<8x128xf32>
    %cst_5 = arith.constant dense<0.000000e+00> : vector<8xf32>
    %11 = vector.multi_reduction <add>, %10, %cst_5 [1] : vector<8x128xf32> to vector<8xf32>
    %12 = vector.shape_cast %11 : vector<8xf32> to vector<8x1xf32>
    %13 = arith.mulf %7, %7 : vector<8x1xf32>
    %cst_6 = arith.constant 6.400000e+01 : f32
    %14 = vector.broadcast %cst_6 : f32 to vector<8x1xf32>
    %15 = arith.mulf %14, %13 : vector<8x1xf32>
    %16 = arith.subf %12, %15 : vector<8x1xf32>
    %cst_7 = arith.constant 1.562500e-02 : f32
    %17 = vector.broadcast %cst_7 : f32 to vector<8x1xf32>
    %18 = arith.mulf %16, %17 : vector<8x1xf32>
    %cst_8 = arith.constant 9.99999974E-6 : f32
    %19 = vector.broadcast %cst_8 : f32 to vector<8x1xf32>
    %20 = arith.addf %18, %19 : vector<8x1xf32>
    %21 = math.rsqrt %20 : vector<8x1xf32>
    %22 = vector.broadcast %21 : vector<8x1xf32> to vector<8x128xf32>
    %23 = arith.mulf %9, %22 : vector<8x128xf32>
    %c0_9 = arith.constant 0 : index
    %c0_10 = arith.constant 0 : index
    %24 = vector.load %arg4[%c0_9, %c0_10] : memref<1x128xf32, #tpu.memory_space<vmem>>, vector<1x128xf32>
    %25 = vector.broadcast %24 : vector<1x128xf32> to vector<8x128xf32>
    %26 = arith.mulf %23, %25 : vector<8x128xf32>
    %c0_11 = arith.constant 0 : index
    %c0_12 = arith.constant 0 : index
    %27 = vector.load %arg5[%c0_11, %c0_12] : memref<1x128xf32, #tpu.memory_space<vmem>>, vector<1x128xf32>
    %28 = vector.broadcast %27 : vector<1x128xf32> to vector<8x128xf32>
    %29 = arith.addf %26, %28 : vector<8x128xf32>
    %c0_13 = arith.constant 0 : index
    %c0_14 = arith.constant 0 : index
    %30 = vector.load %arg6[%c0_13, %c0_14] : memref<8x128xf32, #tpu.memory_space<vmem>>, vector<8x128xf32>
    tpu.vector_store %arg6[%c0_13, %c0_14], %29 {strides = array<i32>} : memref<8x128xf32, #tpu.memory_space<vmem>>, vector<8x128xf32>,
    return
  }
  func.func @transform_0(%arg0: i32, %arg1: i32) -> (i32, i32) {
    %c0_i32 = arith.constant 0 : i32
    return %arg0, %arg1 : i32, i32
  }
  func.func @transform_1(%arg0: i32, %arg1: i32) -> (i32, i32) {
    %c0_i32 = arith.constant 0 : i32
    %c0_i32_0 = arith.constant 0 : i32
    %c0_i32_1 = arith.constant 0 : i32
    return %c0_i32, %c0_i32_0 : i32, i32
  }
  func.func @transform_2(%arg0: i32, %arg1: i32) -> (i32, i32) {
    %c0_i32 = arith.constant 0 : i32
    %c0_i32_0 = arith.constant 0 : i32
    %c0_i32_1 = arith.constant 0 : i32
    return %c0_i32, %c0_i32_0 : i32, i32
  }
  func.func @transform_3(%arg0: i32, %arg1: i32) -> (i32, i32) {
    %c0_i32 = arith.constant 0 : i32
    %c0_i32_0 = arith.constant 0 : i32
    %c0_i32_1 = arith.constant 0 : i32
    return %c0_i32, %c0_i32_0 : i32, i32
  }
  func.func @transform_4(%arg0: i32, %arg1: i32) -> (i32, i32) {
    %c0_i32 = arith.constant 0 : i32
    %c0_i32_0 = arith.constant 0 : i32
    return %arg0, %c0_i32 : i32, i32
  }
}

</mosaic_0001>

<llo_original>
// kernel: tpu_custom_call.1
$region0: #{tpu_custom_call.1}
  #allocation0 [shape = 'u32[]', space=smem, size = 0x4, offset = 0x4, fixed_abs, tag = 'smem constant byte address 0x4 - core index']
  #allocation1 [shape = 'u32[72,128]{1,0:T(1,128)}', space=vmem, size = 0x9000, scoped, tag = 'internal scratch']
  %s0 = inlined_call_operand.hbm [shape: f32[16,32], index: 0, kind: input, shape index: {}]
  %s1 = inlined_call_operand.hbm [shape: f32[32,128], index: 1, kind: input, shape index: {}]
  %s2 = inlined_call_operand.vmem [shape: f32[1,128], index: 2, kind: input, shape index: {}]
  %s3 = inlined_call_operand.vmem [shape: f32[1,128], index: 3, kind: input, shape index: {}]
  %s4 = inlined_call_operand.hbm [shape: f32[16,128], index: 4, kind: output, shape index: {}]
  %s5 = sld [smem:[#allocation0]]
  $region57: #{tpu_custom_call.1} parent=0
    _
  %s7 = ssub.s32 1, %s5
  %s8 = scalar_select 0, %s7, %s5
  $region1: #{tpu_custom_call.1} parent=0
    #allocation2 [shape = 'u8[8192]{0}', space=vmem, size = 0x2000, scoped, tag = 'input window, operand 0']
    #allocation3 [shape = 's32[2]{0}', space=sflag, size = 0x8, scoped, tag = 'scoped memory for tpu_custom_call.1']
    #allocation4 [shape = 's32[2]{0}', space=sflag, size = 0x8, scoped, tag = 'scoped memory for tpu_custom_call.1']
    #allocation5 [shape = 'u8[16384]{0}', space=vmem, size = 0x4000, scoped, tag = 'input window, operand 1, single buffered']
    #allocation6 [shape = 's32[1]{0}', space=sflag, size = 0x4, scoped, tag = 'scoped memory for tpu_custom_call.1']
    #allocation7 [shape = 'u8[8192]{0}', space=vmem, size = 0x2000, scoped, tag = 'output window, operand 0']
    %9 = vsyncpa [#allocation3], 0
    %s10 = scalar_lea.sflag [#allocation3], 1
    %11 = vsyncpa %s10, 0
    %12 = vsyncpa [#allocation6], 0
    %13 = vsyncpa [#allocation4], 0
    %s14 = scalar_lea.sflag [#allocation4], 1
    %15 = vsyncpa %s14, 0
    loop: start=0, step=1, limit=4
    $region2: #{tpu_custom_call.1} parent=1 // loop_pre_header
      _
    $region3: #{tpu_custom_call.1} parent=1 // loop_header
      %s17 = sphi 0, %s21
      %p18 = scmp.ge.s32.totalorder %s17, 4
      %s24 = sphi 0, %s36
      %s25 = sphi 0, %s32
      %s26 = sphi 0, %s24
      %s27 = sphi 0, %s25
      %s28 = sphi 0, %s26
      %s29 = sphi 0, %s27
      %s41 = sphi 0, %s43
      %s44 = sphi 0, %s41
      %s45 = sphi 0, %s44
      %s61 = sphi 0, %s45
      %s65 = sphi 0, %s65
      %s67 = sphi 0, %s65
      %s68 = sphi 0, %s67
      %s82 = sphi 0, %s68
      %s86 = sphi 0, %s86
      %s88 = sphi 0, %s86
      %s89 = sphi 0, %s88
      %s103 = sphi 0, %s89
      %s107 = sphi 0, %s107
      %s109 = sphi 0, %s107
      %s110 = sphi 0, %s109
      %s124 = sphi 0, %s110
      %s130 = sphi 0, %s132
      %s133 = sphi 0, %s130
      %s134 = sphi 0, %s133
      %s150 = sphi 0, %s134
    $region4: #{tpu_custom_call.1} parent=1 // loop_header_branch
      %20 = sbr.rel (%p18) target = $region8
    $region5: #{tpu_custom_call.1} parent=1 // loop_body
      %s22 = ssub.s32 %s17, 1
      %s23 = ssub.s32 %s17, 2
      %s30 = sadd.s32 1, %s25
      %p31 = scmp.ge.s32.totalorder %s30, 1
      %s32 = scalar_select %p31, 0, %s30
      %s33 = sadd.s32 1, %s24
      %s34 = scalar_select %p31, %s33, %s24
      %p35 = scmp.ge.s32.totalorder %s34, 2
      %s36 = scalar_select %p35, 0, %s34
      %s37 = ssub.s32 %s24, %s36
      %s38 = ssub.s32 %s25, %s32
      %s39 = sor.u32 %s37, %s38
      %p40 = scmp.eq.s32.totalorder %s39, 0
      %s42 = sadd.s32 %s41, 1
      %s43 = scalar_select %p40, %s41, %s42
      %p46 = pneg %p40
      %p47 = scmp.eq.s32.totalorder %s17, 1
      %p48 = por %p46, %p47
      %p49 = scmp.ne.s32.totalorder %s41, %s44
      %p50 = scmp.eq.s32.totalorder %s17, 0
      %p51 = por %p49, %p50
      %p52 = scmp.ne.s32.totalorder %s41, %s44
      %p53 = scmp.eq.s32.totalorder %s22, 1
      %p54 = por %p52, %p53
      %p55 = scmp.ne.s32.totalorder %s44, %s45
      %p56 = scmp.eq.s32.totalorder %s22, 0
      %p57 = por %p55, %p56
      %p58 = scmp.ne.s32.totalorder %s44, %s45
      %p59 = scmp.eq.s32.totalorder %s23, 1
      %p60 = por %p58, %p59
      %p62 = scmp.ne.s32.totalorder %s45, %s61
      %p63 = scmp.eq.s32.totalorder %s23, 0
      %p64 = por %p62, %p63
      %s66 = sadd.s32 %s65, 1
      %p69 = scmp.eq.s32.totalorder %s17, 1
      %p70 = scmp.ne.s32.totalorder %s65, %s67
      %p71 = scmp.eq.s32.totalorder %s17, 0
      %p72 = por %p70, %p71
      %p73 = scmp.ne.s32.totalorder %s65, %s67
      %p74 = scmp.eq.s32.totalorder %s22, 1
      %p75 = por %p73, %p74
      %p76 = scmp.ne.s32.totalorder %s67, %s68
      %p77 = scmp.eq.s32.totalorder %s22, 0
      %p78 = por %p76, %p77
      %p79 = scmp.ne.s32.totalorder %s67, %s68
      %p80 = scmp.eq.s32.totalorder %s23, 1
      %p81 = por %p79, %p80
      %p83 = scmp.ne.s32.totalorder %s68, %s82
      %p84 = scmp.eq.s32.totalorder %s23, 0
      %p85 = por %p83, %p84
      %s87 = sadd.s32 %s86, 1
      %p90 = scmp.eq.s32.totalorder %s17, 1
      %p91 = scmp.ne.s32.totalorder %s86, %s88
      %p92 = scmp.eq.s32.totalorder %s17, 0
      %p93 = por %p91, %p92
      %p94 = scmp.ne.s32.totalorder %s86, %s88
      %p95 = scmp.eq.s32.totalorder %s22, 1
      %p96 = por %p94, %p95
      %p97 = scmp.ne.s32.totalorder %s88, %s89
      %p98 = scmp.eq.s32.totalorder %s22, 0
      %p99 = por %p97, %p98
      %p100 = scmp.ne.s32.totalorder %s88, %s89
      %p101 = scmp.eq.s32.totalorder %s23, 1
      %p102 = por %p100, %p101
      %p104 = scmp.ne.s32.totalorder %s89, %s103
      %p105 = scmp.eq.s32.totalorder %s23, 0
      %p106 = por %p104, %p105
      %s108 = sadd.s32 %s107, 1
      %p111 = scmp.eq.s32.totalorder %s17, 1
      %p112 = scmp.ne.s32.totalorder %s107, %s109
      %p113 = scmp.eq.s32.totalorder %s17, 0
      %p114 = por %p112, %p113
      %p115 = scmp.ne.s32.totalorder %s107, %s109
      %p116 = scmp.eq.s32.totalorder %s22, 1
      %p117 = por %p115, %p116
      %p118 = scmp.ne.s32.totalorder %s109, %s110
      %p119 = scmp.eq.s32.totalorder %s22, 0
      %p120 = por %p118, %p119
      %p121 = scmp.ne.s32.totalorder %s109, %s110
      %p122 = scmp.eq.s32.totalorder %s23, 1
      %p123 = por %p121, %p122
      %p125 = scmp.ne.s32.totalorder %s110, %s124
      %p126 = scmp.eq.s32.totalorder %s23, 0
      %p127 = por %p125, %p126
      %s128 = ssub.s32 %s24, %s36
      %p129 = scmp.eq.s32.totalorder %s128, 0
      %s131 = sadd.s32 %s130, 1
      %s132 = scalar_select %p129, %s130, %s131
      %p135 = pneg %p129
      %p136 = scmp.eq.s32.totalorder %s17, 1
      %p137 = por %p135, %p136
      %p138 = scmp.ne.s32.totalorder %s130, %s133
      %p139 = scmp.eq.s32.totalorder %s17, 0
      %p140 = por %p138, %p139
      %p141 = scmp.ne.s32.totalorder %s130, %s133
      %p142 = scmp.eq.s32.totalorder %s22, 1
      %p143 = por %p141, %p142
      %p144 = scmp.ne.s32.totalorder %s133, %s134
      %p145 = scmp.eq.s32.totalorder %s22, 0
      %p146 = por %p144, %p145
      %p147 = scmp.ne.s32.totalorder %s133, %s134
      %p148 = scmp.eq.s32.totalorder %s23, 1
      %p149 = por %p147, %p148
      %p151 = scmp.ne.s32.totalorder %s134, %s150
      %p152 = scmp.eq.s32.totalorder %s23, 0
      %p153 = por %p151, %p152
      %p154 = scmp.le.s32.totalorder 1, %s17
      %p155 = scmp.lt.s32.totalorder %s17, 3
      %p156 = pnand %p154, %p155
      %p157 = pneg %p156
      // Predicated region
      $region9: #{tpu_custom_call.1} parent=5 // pred_check
        _
      $region10: #{tpu_custom_call.1} parent=5 // pred_check_branch
        %159 = sbr.rel (%p156) target = $region12
      $region11: #{tpu_custom_call.1} parent=5 // pred_region
        %s160 = ssub.s32 %s17, 1
        // Predicated region
        $region13: #{tpu_custom_call.1} parent=11 // pred_check
          %p161 = pneg %p78
        $region14: #{tpu_custom_call.1} parent=11 // pred_check_branch
          %163 = sbr.rel (%p161) target = $region16
        $region15: #{tpu_custom_call.1} parent=11 // pred_region
          %165 = vsyncadd [#allocation6], 0
          %s166 = sshll.u32 %s1, 4
          %s167 = int_to_ptr.hbm [resolvable:$true] %s166
          %s168 = sshll.u32 [#allocation5], 4
          %s169 = int_to_ptr.vmem [resolvable:$true] %s168
          %174 = dma.hbm_to_vmem [thread:$0]  %s167, 512, %s169, [#allocation6], 128, 128, 8
        $region16: #{tpu_custom_call.1} parent=11 // pred_fallthru
          _
        // Predicated region
        $region17: #{tpu_custom_call.1} parent=11 // pred_check
          %p175 = pneg %p99
        $region18: #{tpu_custom_call.1} parent=11 // pred_check_branch
          %177 = sbr.rel (%p175) target = $region20
        $region19: #{tpu_custom_call.1} parent=11 // pred_region
          _
        $region20: #{tpu_custom_call.1} parent=11 // pred_fallthru
          _
        // Predicated region
        $region21: #{tpu_custom_call.1} parent=11 // pred_check
          %p178 = pneg %p120
        $region22: #{tpu_custom_call.1} parent=11 // pred_check_branch
          %180 = sbr.rel (%p178) target = $region24
        $region23: #{tpu_custom_call.1} parent=11 // pred_region
          _
        $region24: #{tpu_custom_call.1} parent=11 // pred_fallthru
          _
      $region12: #{tpu_custom_call.1} parent=5 // pred_fallthru
        _
      %p181 = scmp.lt.s32.totalorder %s17, 2
      // Predicated region
      $region25: #{tpu_custom_call.1} parent=5 // pred_check
        %p182 = pneg %p181
      $region26: #{tpu_custom_call.1} parent=5 // pred_check_branch
        %184 = sbr.rel (%p182) target = $region28
      $region27: #{tpu_custom_call.1} parent=5 // pred_region
        // Predicated region
        $region29: #{tpu_custom_call.1} parent=27 // pred_check
          %p185 = pneg %p51
        $region30: #{tpu_custom_call.1} parent=27 // pred_check_branch
          %187 = sbr.rel (%p185) target = $region32
        $region31: #{tpu_custom_call.1} parent=27 // pred_region
          %s188 = sand.u32 %s41, 1
          %s189 = scalar_lea.sflag [#allocation3], %s188
          %s190 = sand.u32 %s41, 1
          %s191 = smul.addr %s190, 8
          %s192 = scalar_lea.vmem [#allocation2], %s191
          %194 = vsyncadd %s189, 0
          %s195 = sadd.s32 %s25, %s24
          %s196 = smul.addr %s195, 8
          %s197 = scalar_lea.hbm %s0, %s196
          %s199 = sshll.u32 %s197, 4
          %s200 = int_to_ptr.hbm [resolvable:$true] %s199
          %s201 = sshll.u32 %s192, 4
          %s202 = int_to_ptr.vmem [resolvable:$true] %s201
          %204 = dma.hbm_to_vmem [thread:$0]  %s200, 128, %s202, %s189
        $region32: #{tpu_custom_call.1} parent=27 // pred_fallthru
          _
      $region28: #{tpu_custom_call.1} parent=5 // pred_fallthru
        _
      %p205 = scmp.le.s32.totalorder 1, %s17
      %p206 = scmp.lt.s32.totalorder %s17, 3
      %p207 = pnand %p205, %p206
      %p208 = pneg %p207
      // Predicated region
      $region33: #{tpu_custom_call.1} parent=5 // pred_check
        _
      $region34: #{tpu_custom_call.1} parent=5 // pred_check_branch
        %210 = sbr.rel (%p207) target = $region36
      $region35: #{tpu_custom_call.1} parent=5 // pred_region
        %s211 = ssub.s32 %s17, 1
        %s212 = sand.u32 %s44, 1
        %s213 = scalar_lea.sflag [#allocation3], %s212
        %s214 = sand.u32 %s44, 1
        %s215 = smul.addr %s214, 8
        %s216 = scalar_lea.vmem [#allocation2], %s215
        // Predicated region
        $region37: #{tpu_custom_call.1} parent=35 // pred_check
          %p217 = pneg %p57
        $region38: #{tpu_custom_call.1} parent=35 // pred_check_branch
          %219 = sbr.rel (%p217) target = $region40
        $region39: #{tpu_custom_call.1} parent=35 // pred_region
          %221 = dma.done %s213, 128
        $region40: #{tpu_custom_call.1} parent=35 // pred_fallthru
          _
        // Predicated region
        $region41: #{tpu_custom_call.1} parent=35 // pred_check
          %p222 = pneg %p78
        $region42: #{tpu_custom_call.1} parent=35 // pred_check_branch
          %224 = sbr.rel (%p222) target = $region44
        $region43: #{tpu_custom_call.1} parent=35 // pred_region
          %226 = dma.done [#allocation6], 512
        $region44: #{tpu_custom_call.1} parent=35 // pred_fallthru
          _
        %s227 = sand.u32 %s44, 1
        %s228 = scalar_lea.sflag [#allocation3], %s227
        %s229 = sand.u32 %s44, 1
        %s230 = smul.addr %s229, 8
        %s231 = scalar_lea.vmem [#allocation2], %s230
        %p232 = pneg %p57
        %p233 = pneg %p54
        %p234 = pneg %p78
        %p235 = pneg %p75
        %p236 = pneg %p99
        %p237 = pneg %p96
        %p238 = pneg %p120
        %p239 = pneg %p117
        %p240 = pneg %p146
        %p241 = pneg %p143
        %s242 = sand.u32 %s133, 1
        %s243 = scalar_lea.sflag [#allocation4], %s242
        %s244 = sand.u32 %s133, 1
        %s245 = smul.addr %s244, 8
        %s246 = scalar_lea.vmem [#allocation7], %s245
        %v247 = vld [vmem:[%s216] sm:$0xff]
        %v248 = vld [vmem:[#allocation5] sm:$0xff]
        %v249 = vld [vmem:[#allocation5 + $0x8] sm:$0xff]
        %v250 = vld [vmem:[#allocation5 + $0x10] sm:$0xff]
        %v251 = vld [vmem:[#allocation5 + $0x18] sm:$0xff]
        %vm252 = vcmask 261120
        %v254 = vsel %vm252, %v247, 0
        %256 = vmatpush.msra.mxu0 0.0
        %257 = vmatpush.msra.mxu0 0.0
        %258 = vmatpush.msra.mxu0 0.0
        %259 = vmatpush.msra.mxu0 0.0
        %260 = vmatpush.msra.mxu0 0.0
        %261 = vmatpush.msra.mxu0 0.0
        %262 = vmatpush.msra.mxu0 0.0
        %263 = vmatpush.msra.mxu0 0.0
        %264 = vmatpush.msra.mxu0 0.0
        %265 = vmatpush.msra.mxu0 0.0
        %266 = vmatpush.msra.mxu0 0.0
        %267 = vmatpush.msra.mxu0 0.0
        %268 = vmatpush.msra.mxu0 %v251
        %269 = vmatpush.msra.mxu0 %v250
        %270 = vmatpush.msra.mxu0 %v249
        %271 = vmatpush.msra.mxu0 %v248
        %272 = vmatmul.f32.gmra.mxu0 %v254
        %v273 = vpop.f32.mrf.mxu0
        %v274 = vadd.f32 0.0, %v273
        %275 = vdwg.mxu0
        %v276 = vand.u32 2147483647, %v274
        %vm277 = vcmp.le.f32.partialorder %v276, 0.7853982
        %vm278 = vcmp.lt.s32.totalorder %v274, 0
        %v279 = vand.u32 %v274, 2139095040
        %v280 = vshrl.u32 %v279, 23
        %v281 = vsub.s32 %v280, 127
        %v282 = vand.u32 2147483647, %v274
        %v283 = vand.u32 %v282, 8388607
        %v284 = vor.u32 %v283, 8388608
        %v285 = vsub.s32 0, %v284
        %v286 = vadd.s32 %v281, 1
        %vm287 = vcmp.gt.s32.totalorder %v286, 0
        %v288 = vsel %vm287, %v286, 0
        %v289 = vshrl.u32 %v288, 5
        %v290 = vand.u32 %v288, 31
        %v291 = vsub.s32 32, %v290
        %v292 = vshrl.u32 683565275, %v291
        %v293 = vshll.u32 683565275, %v290
        %v294 = vshrl.u32 2475754826, %v291
        %v295 = vor.u32 %v293, %v294
        %v296 = vshll.u32 2475754826, %v290
        %v297 = vshrl.u32 2131351028, %v291
        %v298 = vor.u32 %v296, %v297
        %v299 = vshll.u32 2131351028, %v290
        %v300 = vshrl.u32 2102212464, %v291
        %v301 = vor.u32 %v299, %v300
        %v302 = vshll.u32 2102212464, %v290
        %v303 = vshrl.u32 920167782, %v291
        %v304 = vor.u32 %v302, %v303
        %v305 = vshll.u32 920167782, %v290
        %v306 = vshrl.u32 1326507024, %v291
        %v307 = vor.u32 %v305, %v306
        %vm308 = vcmp.lt.s32.totalorder %v289, 1
        %vm309 = vcmp.lt.s32.totalorder %v289, 2
        %vm310 = vcmp.lt.s32.totalorder %v289, 3
        %vm311 = vcmp.lt.s32.totalorder %v289, 4
        %v312 = vsel %vm308, %v292, %v295
        %v313 = vsel %vm311, %v301, 2102212464
        %v314 = vsel %vm310, %v298, %v313
        %v315 = vsel %vm309, %v312, %v314
        %v316 = vsel %vm308, %v295, %v298
        %v317 = vsel %vm311, %v304, 920167782
        %v318 = vsel %vm310, %v301, %v317
        %v319 = vsel %vm309, %v316, %v318
        %v320 = vsel %vm308, %v298, %v301
        %v321 = vsel %vm311, %v307, 1326507024
        %v322 = vsel %vm310, %v304, %v321
        %v323 = vsel %vm309, %v320, %v322
        %v324 = vshll.u32 %v284, 8
        %v325 = vand.u32 %v324, 65535
        %v326 = vshrl.u32 %v324, 16
        %v327 = vand.u32 %v323, 65535
        %v328 = vshrl.u32 %v323, 16
        %v329 = vmul.u32 %v325, %v327
        %v330 = vmul.u32 %v325, %v328
        %v331 = vmul.u32 %v326, %v327
        %v332 = vmul.u32 %v326, %v328
        %v333 = vshll.u32 %v330, 16
        %v334 = vshrl.u32 %v330, 16
        %v335 = vshll.u32 %v331, 16
        %v336 = vshrl.u32 %v331, 16
        %vm337 = vc.u32 %v329, %v333
        %v338 = vsel %vm337, 1, 0
        %v339 = vadd.s32 %v329, %v333
        %v340 = vadd.s32 %v332, %v338
        %vm341 = vc.u32 %v339, %v335
        %v342 = vsel %vm341, 1, 0
        %v343 = vadd.s32 %v339, %v335
        %v344 = vadd.s32 %v340, %v342
        %v345 = vadd.s32 %v344, %v334
        %v346 = vadd.s32 %v345, %v336
        %v347 = vand.u32 %v324, 65535
        %v348 = vshrl.u32 %v324, 16
        %v349 = vand.u32 %v319, 65535
        %v350 = vshrl.u32 %v319, 16
        %v351 = vmul.u32 %v347, %v349
        %v352 = vmul.u32 %v347, %v350
        %v353 = vmul.u32 %v348, %v349
        %v354 = vmul.u32 %v348, %v350
        %v355 = vshll.u32 %v352, 16
        %v356 = vshrl.u32 %v352, 16
        %v357 = vshll.u32 %v353, 16
        %v358 = vshrl.u32 %v353, 16
        %vm359 = vc.u32 %v351, %v355
        %v360 = vsel %vm359, 1, 0
        %v361 = vadd.s32 %v351, %v355
        %v362 = vadd.s32 %v354, %v360
        %vm363 = vc.u32 %v361, %v357
        %v364 = vsel %vm363, 1, 0
        %v365 = vadd.s32 %v361, %v357
        %v366 = vadd.s32 %v362, %v364
        %v367 = vadd.s32 %v366, %v356
        %v368 = vadd.s32 %v367, %v358
        %v369 = vmul.u32 %v324, %v315
        %v370 = vadd.s32 %v346, %v365
        %vm371 = vc.u32 %v346, %v365
        %v372 = vadd.s32 %v368, 1
        %v373 = vsel %vm371, %v372, %v368
        %v374 = vadd.s32 %v369, %v373
        %v375 = vadd.s32 %v374, 536870912
        %v376 = vshrl.u32 %v375, 30
        %v377 = vshll.u32 %v376, 30
        %v378 = vsub.s32 %v374, %v377
        %vm379 = vcmp.lt.s32.totalorder %v378, 0
        %v380 = vsub.s32 0, %v378
        %v381 = vsel %vm379, %v380, %v378
        %v382 = vclz %v381
        %v383 = vsub.s32 %v382, 2
        %vm384 = vcmp.gt.s32.totalorder 0, %v383
        %v385 = vsel %vm384, 0, %v383
        %v386 = vsub.s32 32, %v385
        %v387 = vshll.u32 %v378, %v385
        %v388 = vshrl.u32 %v370, %v386
        %v389 = vor.u32 %v387, %v388
        %v390 = vsub.s32 4294967266, %v385
        %v391 = vadd.s32 %v390, 127
        %v392 = vshll.u32 %v391, 23
        %v393 = vor.u32 4788187, %v392
        %v394 = vand.u32 2147483647, %v393
        %v396 = vcvt.s32.f32 %v389
        %v397 = vmul.f32 %v396, %v394
        %v398 = vxor.u32 %v397, 2147483648
        %v399 = vsel %vm278, %v398, %v397
        %v400 = vsub.s32 4, %v376
        %v401 = vsel %vm278, %v400, %v376
        %v402 = vsel %vm277, %v274, %v399
        %v403 = vsel %vm277, 0, %v401
        %v404 = vmul.f32 %v402, %v402
        %v405 = vmul.f32 %v404, -0.001358992
        %v406 = vadd.f32 %v405, 0.041655596
        %v407 = vmul.f32 %v404, %v406
        %v408 = vadd.f32 %v407, -0.4999988
        %v409 = vmul.f32 %v404, %v408
        %v410 = vadd.f32 1.0, %v409
        %v411 = vmul.f32 %v402, %v402
        %v412 = vmul.f32 %v411, -0.00019511016
        %v413 = vadd.f32 %v412, 0.008332121
        %v414 = vmul.f32 %v411, %v413
        %v415 = vadd.f32 %v414, -0.16666654
        %v416 = vmul.f32 %v411, %v415
        %v417 = vadd.f32 %v416, 1.0
        %v418 = vmul.f32 %v417, %v402
        %vm419 = vweird.f32 %v274
        %v420 = vadd.s32 %v403, 3
        %v421 = vand.u32 %v420, 3
        %vm422 = vcmp.lt.s32.totalorder %v421, 2
        %vm423 = vcmp.eq.s32.totalorder %v421, 0
        %v424 = vxor.u32 %v418, 2147483648
        %v425 = vsel %vm423, %v410, %v424
        %vm426 = vcmp.eq.s32.totalorder %v421, 2
        %v427 = vxor.u32 %v410, 2147483648
        %v428 = vsel %vm426, %v427, %v418
        %v429 = vsel %vm422, %v425, %v428
        %v430 = vsel %vm419, nan, %v429
        %431 = vadd.xlane.f32.xlu0 %v430
        %v432 = vpop.xlane.xlu0 %431
        %v433 = vmul.f32 %v432, 0.015625
        %v434 = vsub.f32 %v430, %v433
        %v435 = vmul.f32 %v434, %v434
        %436 = vadd.xlane.f32.xlu0 %v435
        %v437 = vpop.xlane.xlu0 %436
        %v438 = vmul.f32 %v433, %v433
        %v439 = vmul.f32 %v438, 64.0
        %v440 = vsub.f32 %v437, %v439
        %v441 = vmul.f32 %v440, 0.015625
        %v442 = vadd.f32 %v441, 1e-05
        %v443 = vrsqrt.pop %v442
        %v444 = vmul.f32 %v443, %v442
        %v445 = vmul.f32 %v444, %v443
        %v446 = vmul.f32 0.5, %v445
        %v447 = vsub.f32 1.5, %v446
        %v448 = vmul.f32 %v443, %v447
        %vm449 = vweird.f32 %v442
        %vm450 = vweird.f32 %v443
        %vm451 = vmor %vm449, %vm450
        %v452 = vsel %vm451, %v443, %v448
        %v453 = vmul.f32 %v434, %v452
        %v454 = vld [vmem:[%s2] sm:$0x1]
        %v456 = vperm.slane %v454, 0
        %v458 = vmul.f32 %v453, %v456
        %v459 = vld [vmem:[%s3] sm:$0x1]
        %v461 = vperm.slane %v459, 0
        %v463 = vadd.f32 %v458, %v461
        %464 = vst [vmem:[%s246] sm:$0xff] %v463
        %s465 = sand.u32 %s133, 1
        %s466 = scalar_lea.sflag [#allocation4], %s465
        %s467 = sand.u32 %s133, 1
        %s468 = smul.addr %s467, 8
        %s469 = scalar_lea.vmem [#allocation7], %s468
        // Predicated region
        $region45: #{tpu_custom_call.1} parent=35 // pred_check
          %p470 = pneg %p143
        $region46: #{tpu_custom_call.1} parent=35 // pred_check_branch
          %472 = sbr.rel (%p470) target = $region48
        $region47: #{tpu_custom_call.1} parent=35 // pred_region
          %474 = vsyncadd %s466, 0
          %s475 = smul.addr %s26, 8
          %s476 = scalar_lea.hbm %s4, %s475
          %s478 = sshll.u32 %s469, 4
          %s479 = int_to_ptr.vmem [resolvable:$true] %s478
          %s480 = sshll.u32 %s476, 4
          %s481 = int_to_ptr.hbm [resolvable:$true] %s480
          %483 = dma.vmem_to_hbm [thread:$0]  %s479, 128, %s481, %s466
        $region48: #{tpu_custom_call.1} parent=35 // pred_fallthru
          _
      $region36: #{tpu_custom_call.1} parent=5 // pred_fallthru
        _
      %p484 = scmp.le.s32.totalorder 2, %s17
      // Predicated region
      $region49: #{tpu_custom_call.1} parent=5 // pred_check
        %p485 = pneg %p484
      $region50: #{tpu_custom_call.1} parent=5 // pred_check_branch
        %487 = sbr.rel (%p485) target = $region52
      $region51: #{tpu_custom_call.1} parent=5 // pred_region
        %s488 = ssub.s32 %s17, 2
        // Predicated region
        $region53: #{tpu_custom_call.1} parent=51 // pred_check
          %p489 = pneg %p149
        $region54: #{tpu_custom_call.1} parent=51 // pred_check_branch
          %491 = sbr.rel (%p489) target = $region56
        $region55: #{tpu_custom_call.1} parent=51 // pred_region
          %s492 = sand.u32 %s134, 1
          %s493 = scalar_lea.sflag [#allocation4], %s492
          %s494 = sand.u32 %s134, 1
          %s495 = smul.addr %s494, 8
          %s496 = scalar_lea.vmem [#allocation7], %s495
          %498 = dma.done %s493, 128
        $region56: #{tpu_custom_call.1} parent=51 // pred_fallthru
          _
      $region52: #{tpu_custom_call.1} parent=5 // pred_fallthru
        _
    $region6: #{tpu_custom_call.1} parent=1 // loop_footer
      %s21 = sadd.s32 1, %s17
    $region7: #{tpu_custom_call.1} parent=1 // loop_footer_branch
      %16 = sbr.rel target = $region3
    $region8: #{tpu_custom_call.1} parent=1 // loop_exit
      _
    %499 = vsyncpa [#allocation3], 1
    %s500 = scalar_lea.sflag [#allocation3], 1
    %501 = vsyncpa %s500, 1
    %502 = vsyncpa [#allocation6], 1
    %503 = vsyncpa [#allocation4], 1
    %s504 = scalar_lea.sflag [#allocation4], 1
    %505 = vsyncpa %s504, 1

// kernel: tpu_custom_call.1
$region0: #{tpu_custom_call.1}
  #allocation0 [shape = 'u32[]', space=smem, size = 0x4, offset = 0x4, fixed_abs, tag = 'smem constant byte address 0x4 - core index']
  #allocation1 [shape = 'u32[72,128]{1,0:T(1,128)}', space=vmem, size = 0x9000, scoped, tag = 'internal scratch']
  %s0 = inlined_call_operand.hbm [shape: f32[16,32], index: 0, kind: input, shape index: {}]
  %s1 = inlined_call_operand.hbm [shape: f32[32,128], index: 1, kind: input, shape index: {}]
  %s2 = inlined_call_operand.vmem [shape: f32[1,128], index: 2, kind: input, shape index: {}]
  %s3 = inlined_call_operand.vmem [shape: f32[1,128], index: 3, kind: input, shape index: {}]
  %s4 = inlined_call_operand.hbm [shape: f32[16,128], index: 4, kind: output, shape index: {}]
  %s5 = sld [smem:[#allocation0]]
  $region57: #{tpu_custom_call.1} parent=0
    _
  %s7 = ssub.s32 1, %s5
  %s8 = scalar_select 0, %s7, %s5
  $region1: #{tpu_custom_call.1} parent=0
    #allocation2 [shape = 'u8[8192]{0}', space=vmem, size = 0x2000, scoped, tag = 'input window, operand 0']
    #allocation3 [shape = 's32[2]{0}', space=sflag, size = 0x8, scoped, tag = 'scoped memory for tpu_custom_call.1']
    #allocation4 [shape = 's32[2]{0}', space=sflag, size = 0x8, scoped, tag = 'scoped memory for tpu_custom_call.1']
    #allocation5 [shape = 'u8[16384]{0}', space=vmem, size = 0x4000, scoped, tag = 'input window, operand 1, single buffered']
    #allocation6 [shape = 's32[1]{0}', space=sflag, size = 0x4, scoped, tag = 'scoped memory for tpu_custom_call.1']
    #allocation7 [shape = 'u8[8192]{0}', space=vmem, size = 0x2000, scoped, tag = 'output window, operand 0']
    %9 = vsyncpa [#allocation3], 0
    %s10 = scalar_lea.sflag [#allocation3], 1
    %11 = vsyncpa %s10, 0
    %12 = vsyncpa [#allocation6], 0
    %13 = vsyncpa [#allocation4], 0
    %s14 = scalar_lea.sflag [#allocation4], 1
    %15 = vsyncpa %s14, 0
    loop: start=0, step=1, limit=4
    $region2: #{tpu_custom_call.1} parent=1 // loop_pre_header
      _
    $region3: #{tpu_custom_call.1} parent=1 // loop_header
      %s17 = sphi 0, %s21
      %p18 = scmp.ge.s32.totalorder %s17, 4
      %s24 = sphi 0, %s36
      %s25 = sphi 0, %s32
      %s26 = sphi 0, %s24
      %s27 = sphi 0, %s25
      %s28 = sphi 0, %s26
      %s29 = sphi 0, %s27
      %s41 = sphi 0, %s43
      %s44 = sphi 0, %s41
      %s45 = sphi 0, %s44
      %s61 = sphi 0, %s45
      %s65 = sphi 0, %s65
      %s67 = sphi 0, %s65
      %s68 = sphi 0, %s67
      %s82 = sphi 0, %s68
      %s86 = sphi 0, %s86
      %s88 = sphi 0, %s86
      %s89 = sphi 0, %s88
      %s103 = sphi 0, %s89
      %s107 = sphi 0, %s107
      %s109 = sphi 0, %s107
      %s110 = sphi 0, %s109
      %s124 = sphi 0, %s110
      %s130 = sphi 0, %s132
      %s133 = sphi 0, %s130
      %s134 = sphi 0, %s133
      %s150 = sphi 0, %s134
    $region4: #{tpu_custom_call.1} parent=1 // loop_header_branch
      %20 = sbr.rel (%p18) target = $region8
    $region5: #{tpu_custom_call.1} parent=1 // loop_body
      %s22 = ssub.s32 %s17, 1
      %s23 = ssub.s32 %s17, 2
      %s30 = sadd.s32 1, %s25
      %p31 = scmp.ge.s32.totalorder %s30, 1
      %s32 = scalar_select %p31, 0, %s30
      %s33 = sadd.s32 1, %s24
      %s34 = scalar_select %p31, %s33, %s24
      %p35 = scmp.ge.s32.totalorder %s34, 2
      %s36 = scalar_select %p35, 0, %s34
      %s37 = ssub.s32 %s24, %s36
      %s38 = ssub.s32 %s25, %s32
      %s39 = sor.u32 %s37, %s38
      %p40 = scmp.eq.s32.totalorder %s39, 0
      %s42 = sadd.s32 %s41, 1
      %s43 = scalar_select %p40, %s41, %s42
      %p46 = pneg %p40
      %p47 = scmp.eq.s32.totalorder %s17, 1
      %p48 = por %p46, %p47
      %p49 = scmp.ne.s32.totalorder %s41, %s44
      %p50 = scmp.eq.s32.totalorder %s17, 0
      %p51 = por %p49, %p50
      %p52 = scmp.ne.s32.totalorder %s41, %s44
      %p53 = scmp.eq.s32.totalorder %s22, 1
      %p54 = por %p52, %p53
      %p55 = scmp.ne.s32.totalorder %s44, %s45
      %p56 = scmp.eq.s32.totalorder %s22, 0
      %p57 = por %p55, %p56
      %p58 = scmp.ne.s32.totalorder %s44, %s45
      %p59 = scmp.eq.s32.totalorder %s23, 1
      %p60 = por %p58, %p59
      %p62 = scmp.ne.s32.totalorder %s45, %s61
      %p63 = scmp.eq.s32.totalorder %s23, 0
      %p64 = por %p62, %p63
      %s66 = sadd.s32 %s65, 1
      %p69 = scmp.eq.s32.totalorder %s17, 1
      %p70 = scmp.ne.s32.totalorder %s65, %s67
      %p71 = scmp.eq.s32.totalorder %s17, 0
      %p72 = por %p70, %p71
      %p73 = scmp.ne.s32.totalorder %s65, %s67
      %p74 = scmp.eq.s32.totalorder %s22, 1
      %p75 = por %p73, %p74
      %p76 = scmp.ne.s32.totalorder %s67, %s68
      %p77 = scmp.eq.s32.totalorder %s22, 0
      %p78 = por %p76, %p77
      %p79 = scmp.ne.s32.totalorder %s67, %s68
      %p80 = scmp.eq.s32.totalorder %s23, 1
      %p81 = por %p79, %p80
      %p83 = scmp.ne.s32.totalorder %s68, %s82
      %p84 = scmp.eq.s32.totalorder %s23, 0
      %p85 = por %p83, %p84
      %s87 = sadd.s32 %s86, 1
      %p90 = scmp.eq.s32.totalorder %s17, 1
      %p91 = scmp.ne.s32.totalorder %s86, %s88
      %p92 = scmp.eq.s32.totalorder %s17, 0
      %p93 = por %p91, %p92
      %p94 = scmp.ne.s32.totalorder %s86, %s88
      %p95 = scmp.eq.s32.totalorder %s22, 1
      %p96 = por %p94, %p95
      %p97 = scmp.ne.s32.totalorder %s88, %s89
      %p98 = scmp.eq.s32.totalorder %s22, 0
      %p99 = por %p97, %p98
      %p100 = scmp.ne.s32.totalorder %s88, %s89
      %p101 = scmp.eq.s32.totalorder %s23, 1
      %p102 = por %p100, %p101
      %p104 = scmp.ne.s32.totalorder %s89, %s103
      %p105 = scmp.eq.s32.totalorder %s23, 0
      %p106 = por %p104, %p105
      %s108 = sadd.s32 %s107, 1
      %p111 = scmp.eq.s32.totalorder %s17, 1
      %p112 = scmp.ne.s32.totalorder %s107, %s109
      %p113 = scmp.eq.s32.totalorder %s17, 0
      %p114 = por %p112, %p113
      %p115 = scmp.ne.s32.totalorder %s107, %s109
      %p116 = scmp.eq.s32.totalorder %s22, 1
      %p117 = por %p115, %p116
      %p118 = scmp.ne.s32.totalorder %s109, %s110
      %p119 = scmp.eq.s32.totalorder %s22, 0
      %p120 = por %p118, %p119
      %p121 = scmp.ne.s32.totalorder %s109, %s110
      %p122 = scmp.eq.s32.totalorder %s23, 1
      %p123 = por %p121, %p122
      %p125 = scmp.ne.s32.totalorder %s110, %s124
      %p126 = scmp.eq.s32.totalorder %s23, 0
      %p127 = por %p125, %p126
      %s128 = ssub.s32 %s24, %s36
      %p129 = scmp.eq.s32.totalorder %s128, 0
      %s131 = sadd.s32 %s130, 1
      %s132 = scalar_select %p129, %s130, %s131
      %p135 = pneg %p129
      %p136 = scmp.eq.s32.totalorder %s17, 1
      %p137 = por %p135, %p136
      %p138 = scmp.ne.s32.totalorder %s130, %s133
      %p139 = scmp.eq.s32.totalorder %s17, 0
      %p140 = por %p138, %p139
      %p141 = scmp.ne.s32.totalorder %s130, %s133
      %p142 = scmp.eq.s32.totalorder %s22, 1
      %p143 = por %p141, %p142
      %p144 = scmp.ne.s32.totalorder %s133, %s134
      %p145 = scmp.eq.s32.totalorder %s22, 0
      %p146 = por %p144, %p145
      %p147 = scmp.ne.s32.totalorder %s133, %s134
      %p148 = scmp.eq.s32.totalorder %s23, 1
      %p149 = por %p147, %p148
      %p151 = scmp.ne.s32.totalorder %s134, %s150
      %p152 = scmp.eq.s32.totalorder %s23, 0
      %p153 = por %p151, %p152
      %p154 = scmp.le.s32.totalorder 1, %s17
      %p155 = scmp.lt.s32.totalorder %s17, 3
      %p156 = pnand %p154, %p155
      %p157 = pneg %p156
      // Predicated region
      $region9: #{tpu_custom_call.1} parent=5 // pred_check
        _
      $region10: #{tpu_custom_call.1} parent=5 // pred_check_branch
        %159 = sbr.rel (%p156) target = $region12
      $region11: #{tpu_custom_call.1} parent=5 // pred_region
        %s160 = ssub.s32 %s17, 1
        // Predicated region
        $region13: #{tpu_custom_call.1} parent=11 // pred_check
          %p161 = pneg %p78
        $region14: #{tpu_custom_call.1} parent=11 // pred_check_branch
          %163 = sbr.rel (%p161) target = $region16
        $region15: #{tpu_custom_call.1} parent=11 // pred_region
          %165 = vsyncadd [#allocation6], 0
          %s166 = sshll.u32 %s1, 4
          %s167 = int_to_ptr.hbm [resolvable:$true] %s166
          %s168 = sshll.u32 [#allocation5], 4
          %s169 = int_to_ptr.vmem [resolvable:$true] %s168
          %174 = dma.hbm_to_vmem [thread:$0]  %s167, 512, %s169, [#allocation6], 128, 128, 8
        $region16: #{tpu_custom_call.1} parent=11 // pred_fallthru
          _
        // Predicated region
        $region17: #{tpu_custom_call.1} parent=11 // pred_check
          %p175 = pneg %p99
        $region18: #{tpu_custom_call.1} parent=11 // pred_check_branch
          %177 = sbr.rel (%p175) target = $region20
        $region19: #{tpu_custom_call.1} parent=11 // pred_region
          _
        $region20: #{tpu_custom_call.1} parent=11 // pred_fallthru
          _
        // Predicated region
        $region21: #{tpu_custom_call.1} parent=11 // pred_check
          %p178 = pneg %p120
        $region22: #{tpu_custom_call.1} parent=11 // pred_check_branch
          %180 = sbr.rel (%p178) target = $region24
        $region23: #{tpu_custom_call.1} parent=11 // pred_region
          _
        $region24: #{tpu_custom_call.1} parent=11 // pred_fallthru
          _
      $region12: #{tpu_custom_call.1} parent=5 // pred_fallthru
        _
      %p181 = scmp.lt.s32.totalorder %s17, 2
      // Predicated region
      $region25: #{tpu_custom_call.1} parent=5 // pred_check
        %p182 = pneg %p181
      $region26: #{tpu_custom_call.1} parent=5 // pred_check_branch
        %184 = sbr.rel (%p182) target = $region28
      $region27: #{tpu_custom_call.1} parent=5 // pred_region
        // Predicated region
        $region29: #{tpu_custom_call.1} parent=27 // pred_check
          %p185 = pneg %p51
        $region30: #{tpu_custom_call.1} parent=27 // pred_check_branch
          %187 = sbr.rel (%p185) target = $region32
        $region31: #{tpu_custom_call.1} parent=27 // pred_region
          %s188 = sand.u32 %s41, 1
          %s189 = scalar_lea.sflag [#allocation3], %s188
          %s190 = sand.u32 %s41, 1
          %s191 = smul.addr %s190, 8
          %s192 = scalar_lea.vmem [#allocation2], %s191
          %194 = vsyncadd %s189, 0
          %s195 = sadd.s32 %s25, %s24
          %s196 = smul.addr %s195, 8
          %s197 = scalar_lea.hbm %s0, %s196
          %s199 = sshll.u32 %s197, 4
          %s200 = int_to_ptr.hbm [resolvable:$true] %s199
          %s201 = sshll.u32 %s192, 4
          %s202 = int_to_ptr.vmem [resolvable:$true] %s201
          %204 = dma.hbm_to_vmem [thread:$0]  %s200, 128, %s202, %s189
        $region32: #{tpu_custom_call.1} parent=27 // pred_fallthru
          _
      $region28: #{tpu_custom_call.1} parent=5 // pred_fallthru
        _
      %p205 = scmp.le.s32.totalorder 1, %s17
      %p206 = scmp.lt.s32.totalorder %s17, 3
      %p207 = pnand %p205, %p206
      %p208 = pneg %p207
      // Predicated region
      $region33: #{tpu_custom_call.1} parent=5 // pred_check
        _
      $region34: #{tpu_custom_call.1} parent=5 // pred_check_branch
        %210 = sbr.rel (%p207) target = $region36
      $region35: #{tpu_custom_call.1} parent=5 // pred_region
        %s211 = ssub.s32 %s17, 1
        %s212 = sand.u32 %s44, 1
        %s213 = scalar_lea.sflag [#allocation3], %s212
        %s214 = sand.u32 %s44, 1
        %s215 = smul.addr %s214, 8
        %s216 = scalar_lea.vmem [#allocation2], %s215
        // Predicated region
        $region37: #{tpu_custom_call.1} parent=35 // pred_check
          %p217 = pneg %p57
        $region38: #{tpu_custom_call.1} parent=35 // pred_check_branch
          %219 = sbr.rel (%p217) target = $region40
        $region39: #{tpu_custom_call.1} parent=35 // pred_region
          %221 = dma.done %s213, 128
        $region40: #{tpu_custom_call.1} parent=35 // pred_fallthru
          _
        // Predicated region
        $region41: #{tpu_custom_call.1} parent=35 // pred_check
          %p222 = pneg %p78
        $region42: #{tpu_custom_call.1} parent=35 // pred_check_branch
          %224 = sbr.rel (%p222) target = $region44
        $region43: #{tpu_custom_call.1} parent=35 // pred_region
          %226 = dma.done [#allocation6], 512
        $region44: #{tpu_custom_call.1} parent=35 // pred_fallthru
          _
        %s227 = sand.u32 %s44, 1
        %s228 = scalar_lea.sflag [#allocation3], %s227
        %s229 = sand.u32 %s44, 1
        %s230 = smul.addr %s229, 8
        %s231 = scalar_lea.vmem [#allocation2], %s230
        %p232 = pneg %p57
        %p233 = pneg %p54
        %p234 = pneg %p78
        %p235 = pneg %p75
        %p236 = pneg %p99
        %p237 = pneg %p96
        %p238 = pneg %p120
        %p239 = pneg %p117
        %p240 = pneg %p146
        %p241 = pneg %p143
        %s242 = sand.u32 %s133, 1
        %s243 = scalar_lea.sflag [#allocation4], %s242
        %s244 = sand.u32 %s133, 1
        %s245 = smul.addr %s244, 8
        %s246 = scalar_lea.vmem [#allocation7], %s245
        %v247 = vld [vmem:[%s216] sm:$0xff]
        %v248 = vld [vmem:[#allocation5] sm:$0xff]
        %v249 = vld [vmem:[#allocation5 + $0x8] sm:$0xff]
        %v250 = vld [vmem:[#allocation5 + $0x10] sm:$0xff]
        %v251 = vld [vmem:[#allocation5 + $0x18] sm:$0xff]
        %vm252 = vcmask 261120
        %v254 = vsel %vm252, %v247, 0
        %256 = vmatpush.msra.mxu0 0.0
        %257 = vmatpush.msra.mxu0 0.0
        %258 = vmatpush.msra.mxu0 0.0
        %259 = vmatpush.msra.mxu0 0.0
        %260 = vmatpush.msra.mxu0 0.0
        %261 = vmatpush.msra.mxu0 0.0
        %262 = vmatpush.msra.mxu0 0.0
        %263 = vmatpush.msra.mxu0 0.0
        %264 = vmatpush.msra.mxu0 0.0
        %265 = vmatpush.msra.mxu0 0.0
        %266 = vmatpush.msra.mxu0 0.0
        %267 = vmatpush.msra.mxu0 0.0
        %268 = vmatpush.msra.mxu0 %v251
        %269 = vmatpush.msra.mxu0 %v250
        %270 = vmatpush.msra.mxu0 %v249
        %271 = vmatpush.msra.mxu0 %v248
        %272 = vmatmul.f32.gmra.mxu0 %v254
        %v273 = vpop.f32.mrf.mxu0
        %v274 = vadd.f32 0.0, %v273
        %275 = vdwg.mxu0
        %v276 = vand.u32 2147483647, %v274
        %vm277 = vcmp.le.f32.partialorder %v276, 0.7853982
        %vm278 = vcmp.lt.s32.totalorder %v274, 0
        %v279 = vand.u32 %v274, 2139095040
        %v280 = vshrl.u32 %v279, 23
        %v281 = vsub.s32 %v280, 127
        %v282 = vand.u32 2147483647, %v274
        %v283 = vand.u32 %v282, 8388607
        %v284 = vor.u32 %v283, 8388608
        %v285 = vsub.s32 0, %v284
        %v286 = vadd.s32 %v281, 1
        %vm287 = vcmp.gt.s32.totalorder %v286, 0
        %v288 = vsel %vm287, %v286, 0
        %v289 = vshrl.u32 %v288, 5
        %v290 = vand.u32 %v288, 31
        %v291 = vsub.s32 32, %v290
        %v292 = vshrl.u32 683565275, %v291
        %v293 = vshll.u32 683565275, %v290
        %v294 = vshrl.u32 2475754826, %v291
        %v295 = vor.u32 %v293, %v294
        %v296 = vshll.u32 2475754826, %v290
        %v297 = vshrl.u32 2131351028, %v291
        %v298 = vor.u32 %v296, %v297
        %v299 = vshll.u32 2131351028, %v290
        %v300 = vshrl.u32 2102212464, %v291
        %v301 = vor.u32 %v299, %v300
        %v302 = vshll.u32 2102212464, %v290
        %v303 = vshrl.u32 920167782, %v291
        %v304 = vor.u32 %v302, %v303
        %v305 = vshll.u32 920167782, %v290
        %v306 = vshrl.u32 1326507024, %v291
        %v307 = vor.u32 %v305, %v306
        %vm308 = vcmp.lt.s32.totalorder %v289, 1
        %vm309 = vcmp.lt.s32.totalorder %v289, 2
        %vm310 = vcmp.lt.s32.totalorder %v289, 3
        %vm311 = vcmp.lt.s32.totalorder %v289, 4
        %v312 = vsel %vm308, %v292, %v295
        %v313 = vsel %vm311, %v301, 2102212464
        %v314 = vsel %vm310, %v298, %v313
        %v315 = vsel %vm309, %v312, %v314
        %v316 = vsel %vm308, %v295, %v298
        %v317 = vsel %vm311, %v304, 920167782
        %v318 = vsel %vm310, %v301, %v317
        %v319 = vsel %vm309, %v316, %v318
        %v320 = vsel %vm308, %v298, %v301
        %v321 = vsel %vm311, %v307, 1326507024
        %v322 = vsel %vm310, %v304, %v321
        %v323 = vsel %vm309, %v320, %v322
        %v324 = vshll.u32 %v284, 8
        %v325 = vand.u32 %v324, 65535
        %v326 = vshrl.u32 %v324, 16
        %v327 = vand.u32 %v323, 65535
        %v328 = vshrl.u32 %v323, 16
        %v329 = vmul.u32 %v325, %v327
        %v330 = vmul.u32 %v325, %v328
        %v331 = vmul.u32 %v326, %v327
        %v332 = vmul.u32 %v326, %v328
        %v333 = vshll.u32 %v330, 16
        %v334 = vshrl.u32 %v330, 16
        %v335 = vshll.u32 %v331, 16
        %v336 = vshrl.u32 %v331, 16
        %vm337 = vc.u32 %v329, %v333
        %v338 = vsel %vm337, 1, 0
        %v339 = vadd.s32 %v329, %v333
        %v340 = vadd.s32 %v332, %v338
        %vm341 = vc.u32 %v339, %v335
        %v342 = vsel %vm341, 1, 0
        %v343 = vadd.s32 %v339, %v335
        %v344 = vadd.s32 %v340, %v342
        %v345 = vadd.s32 %v344, %v334
        %v346 = vadd.s32 %v345, %v336
        %v347 = vand.u32 %v324, 65535
        %v348 = vshrl.u32 %v324, 16
        %v349 = vand.u32 %v319, 65535
        %v350 = vshrl.u32 %v319, 16
        %v351 = vmul.u32 %v347, %v349
        %v352 = vmul.u32 %v347, %v350
        %v353 = vmul.u32 %v348, %v349
        %v354 = vmul.u32 %v348, %v350
        %v355 = vshll.u32 %v352, 16
        %v356 = vshrl.u32 %v352, 16
        %v357 = vshll.u32 %v353, 16
        %v358 = vshrl.u32 %v353, 16
        %vm359 = vc.u32 %v351, %v355
        %v360 = vsel %vm359, 1, 0
        %v361 = vadd.s32 %v351, %v355
        %v362 = vadd.s32 %v354, %v360
        %vm363 = vc.u32 %v361, %v357
        %v364 = vsel %vm363, 1, 0
        %v365 = vadd.s32 %v361, %v357
        %v366 = vadd.s32 %v362, %v364
        %v367 = vadd.s32 %v366, %v356
        %v368 = vadd.s32 %v367, %v358
        %v369 = vmul.u32 %v324, %v315
        %v370 = vadd.s32 %v346, %v365
        %vm371 = vc.u32 %v346, %v365
        %v372 = vadd.s32 %v368, 1
        %v373 = vsel %vm371, %v372, %v368
        %v374 = vadd.s32 %v369, %v373
        %v375 = vadd.s32 %v374, 536870912
        %v376 = vshrl.u32 %v375, 30
        %v377 = vshll.u32 %v376, 30
        %v378 = vsub.s32 %v374, %v377
        %vm379 = vcmp.lt.s32.totalorder %v378, 0
        %v380 = vsub.s32 0, %v378
        %v381 = vsel %vm379, %v380, %v378
        %v382 = vclz %v381
        %v383 = vsub.s32 %v382, 2
        %vm384 = vcmp.gt.s32.totalorder 0, %v383
        %v385 = vsel %vm384, 0, %v383
        %v386 = vsub.s32 32, %v385
        %v387 = vshll.u32 %v378, %v385
        %v388 = vshrl.u32 %v370, %v386
        %v389 = vor.u32 %v387, %v388
        %v390 = vsub.s32 4294967266, %v385
        %v391 = vadd.s32 %v390, 127
        %v392 = vshll.u32 %v391, 23
        %v393 = vor.u32 4788187, %v392
        %v394 = vand.u32 2147483647, %v393
        %v396 = vcvt.s32.f32 %v389
        %v397 = vmul.f32 %v396, %v394
        %v398 = vxor.u32 %v397, 2147483648
        %v399 = vsel %vm278, %v398, %v397
        %v400 = vsub.s32 4, %v376
        %v401 = vsel %vm278, %v400, %v376
        %v402 = vsel %vm277, %v274, %v399
        %v403 = vsel %vm277, 0, %v401
        %v404 = vmul.f32 %v402, %v402
        %v405 = vmul.f32 %v404, -0.001358992
        %v406 = vadd.f32 %v405, 0.041655596
        %v407 = vmul.f32 %v404, %v406
        %v408 = vadd.f32 %v407, -0.4999988
        %v409 = vmul.f32 %v404, %v408
        %v410 = vadd.f32 1.0, %v409
        %v411 = vmul.f32 %v402, %v402
        %v412 = vmul.f32 %v411, -0.00019511016
        %v413 = vadd.f32 %v412, 0.008332121
        %v414 = vmul.f32 %v411, %v413
        %v415 = vadd.f32 %v414, -0.16666654
        %v416 = vmul.f32 %v411, %v415
        %v417 = vadd.f32 %v416, 1.0
        %v418 = vmul.f32 %v417, %v402
        %vm419 = vweird.f32 %v274
        %v420 = vadd.s32 %v403, 3
        %v421 = vand.u32 %v420, 3
        %vm422 = vcmp.lt.s32.totalorder %v421, 2
        %vm423 = vcmp.eq.s32.totalorder %v421, 0
        %v424 = vxor.u32 %v418, 2147483648
        %v425 = vsel %vm423, %v410, %v424
        %vm426 = vcmp.eq.s32.totalorder %v421, 2
        %v427 = vxor.u32 %v410, 2147483648
        %v428 = vsel %vm426, %v427, %v418
        %v429 = vsel %vm422, %v425, %v428
        %v430 = vsel %vm419, nan, %v429
        %431 = vadd.xlane.f32.xlu0 %v430
        %v432 = vpop.xlane.xlu0 %431
        %v433 = vmul.f32 %v432, 0.015625
        %v434 = vsub.f32 %v430, %v433
        %v435 = vmul.f32 %v434, %v434
        %436 = vadd.xlane.f32.xlu0 %v435
        %v437 = vpop.xlane.xlu0 %436
        %v438 = vmul.f32 %v433, %v433
        %v439 = vmul.f32 %v438, 64.0
        %v440 = vsub.f32 %v437, %v439
        %v441 = vmul.f32 %v440, 0.015625
        %v442 = vadd.f32 %v441, 1e-05
        %v443 = vrsqrt.pop %v442
        %v444 = vmul.f32 %v443, %v442
        %v445 = vmul.f32 %v444, %v443
        %v446 = vmul.f32 0.5, %v445
        %v447 = vsub.f32 1.5, %v446
        %v448 = vmul.f32 %v443, %v447
        %vm449 = vweird.f32 %v442
        %vm450 = vweird.f32 %v443
        %vm451 = vmor %vm449, %vm450
        %v452 = vsel %vm451, %v443, %v448
        %v453 = vmul.f32 %v434, %v452
        %v454 = vld [vmem:[%s2] sm:$0x1]
        %v456 = vperm.slane %v454, 0
        %v458 = vmul.f32 %v453, %v456
        %v459 = vld [vmem:[%s3] sm:$0x1]
        %v461 = vperm.slane %v459, 0
        %v463 = vadd.f32 %v458, %v461
        %464 = vst [vmem:[%s246] sm:$0xff] %v463
        %s465 = sand.u32 %s133, 1
        %s466 = scalar_lea.sflag [#allocation4], %s465
        %s467 = sand.u32 %s133, 1
        %s468 = smul.addr %s467, 8
        %s469 = scalar_lea.vmem [#allocation7], %s468
        // Predicated region
        $region45: #{tpu_custom_call.1} parent=35 // pred_check
          %p470 = pneg %p143
        $region46: #{tpu_custom_call.1} parent=35 // pred_check_branch
          %472 = sbr.rel (%p470) target = $region48
        $region47: #{tpu_custom_call.1} parent=35 // pred_region
          %474 = vsyncadd %s466, 0
          %s475 = smul.addr %s26, 8
          %s476 = scalar_lea.hbm %s4, %s475
          %s478 = sshll.u32 %s469, 4
          %s479 = int_to_ptr.vmem [resolvable:$true] %s478
          %s480 = sshll.u32 %s476, 4
          %s481 = int_to_ptr.hbm [resolvable:$true] %s480
          %483 = dma.vmem_to_hbm [thread:$0]  %s479, 128, %s481, %s466
        $region48: #{tpu_custom_call.1} parent=35 // pred_fallthru
          _
      $region36: #{tpu_custom_call.1} parent=5 // pred_fallthru
        _
      %p484 = scmp.le.s32.totalorder 2, %s17
      // Predicated region
      $region49: #{tpu_custom_call.1} parent=5 // pred_check
        %p485 = pneg %p484
      $region50: #{tpu_custom_call.1} parent=5 // pred_check_branch
        %487 = sbr.rel (%p485) target = $region52
      $region51: #{tpu_custom_call.1} parent=5 // pred_region
        %s488 = ssub.s32 %s17, 2
        // Predicated region
        $region53: #{tpu_custom_call.1} parent=51 // pred_check
          %p489 = pneg %p149
        $region54: #{tpu_custom_call.1} parent=51 // pred_check_branch
          %491 = sbr.rel (%p489) target = $region56
        $region55: #{tpu_custom_call.1} parent=51 // pred_region
          %s492 = sand.u32 %s134, 1
          %s493 = scalar_lea.sflag [#allocation4], %s492
          %s494 = sand.u32 %s134, 1
          %s495 = smul.addr %s494, 8
          %s496 = scalar_lea.vmem [#allocation7], %s495
          %498 = dma.done %s493, 128
        $region56: #{tpu_custom_call.1} parent=51 // pred_fallthru
          _
      $region52: #{tpu_custom_call.1} parent=5 // pred_fallthru
        _
    $region6: #{tpu_custom_call.1} parent=1 // loop_footer
      %s21 = sadd.s32 1, %s17
    $region7: #{tpu_custom_call.1} parent=1 // loop_footer_branch
      %16 = sbr.rel target = $region3
    $region8: #{tpu_custom_call.1} parent=1 // loop_exit
      _
    %499 = vsyncpa [#allocation3], 1
    %s500 = scalar_lea.sflag [#allocation3], 1
    %501 = vsyncpa %s500, 1
    %502 = vsyncpa [#allocation6], 1
    %503 = vsyncpa [#allocation4], 1
    %s504 = scalar_lea.sflag [#allocation4], 1
    %505 = vsyncpa %s504, 1

</llo_original>
